<compile_context>
chip_gen: v7x
topology: tpu7x:2x2x1
jax: 0.10.0
libtpu: 0.0.40
codegen_flags: <defaults>
</compile_context>

<pallas_src>
import jax
import jax.numpy as jnp
from jax import lax
from jax.experimental import pallas as pl
from jax.experimental.pallas import tpu as pltpu


def _round_up(x, m):
    return (x + m - 1) // m * m


# ----------------------------------------------------------------------------
# Pallas kernel: per-tile weight reparameterization + MXU matmul (K-reduction)
# ----------------------------------------------------------------------------
def bayes_linear_kernel(x_ref, wmu_ref, wsig_ref, weps_ref, b_ref,
                        o_ref, acc_ref):
    k = pl.program_id(1)

    @pl.when(k == 0)
    def _():
        acc_ref[...] = jnp.zeros_like(acc_ref)

    # Reparameterization in f32 (sigma clamp at 2^-30 and ~1e-5-scale products
    # need f32 precision; do NOT do this part in bf16).
    min_std = jnp.float32(2.0 ** (-30))
    std_w = jnp.maximum(wsig_ref[...], min_std)
    w = wmu_ref[...] + std_w * weps_ref[...]                # (tn, tk)

    # NT contraction on the MXU: (Bp, tk) . (tn, tk)^T -> (Bp, tn).
    # No explicit transpose / relayout of the weight tile.
    # (If precision allows on v6e/v7x, x/w could be cast to bf16 here while
    # keeping preferred_element_type=f32; left in f32 for exactness.)
    acc_ref[...] += lax.dot_general(
        x_ref[...], w,
        dimension_numbers=(((1,), (1,)), ((), ())),
        preferred_element_type=jnp.float32)

    @pl.when(k == pl.num_programs(1) - 1)
    def _():
        o_ref[...] = (acc_ref[...] + b_ref[...]).astype(o_ref.dtype)


# ----------------------------------------------------------------------------
# Wrapper: padding, tiling, bias sampling in plain JAX
# ----------------------------------------------------------------------------
def bayes_linear_forward(x, weight_mu, weight_sigma, weight_eps,
                         bias_mu, bias_sigma, bias_eps,
                         *, tn_target=256, tk_target=256):
    """x: (B, in_f); weight_*: (out_f, in_f); bias_*: (out_f,). Returns (B, out_f)."""
    B, K = x.shape
    N, _ = weight_mu.shape

    # Bias sample is O(out_f): compute outside the kernel, pass one row.
    min_std = jnp.float32(2.0 ** (-30))
    bias = bias_mu + jnp.maximum(bias_sigma, min_std) * bias_eps        # (N,)

    # Tile sizes: multiples of 256 for full MXU occupancy on v6e/v7x (also
    # multiples of 128 for v5e), capped by the (padded) problem size.
    Bp = _round_up(B, 8)
    tn = min(tn_target, _round_up(N, 128))
    tk = min(tk_target, _round_up(K, 128))
    Np = _round_up(N, tn)
    Kp = _round_up(K, tk)

    xp = jnp.zeros((Bp, Kp), x.dtype).at[:B, :K].set(x)
    wmu = jnp.zeros((Np, Kp), weight_mu.dtype).at[:N, :K].set(weight_mu)
    wsig = jnp.zeros((Np, Kp), weight_sigma.dtype).at[:N, :K].set(weight_sigma)
    weps = jnp.zeros((Np, Kp), weight_eps.dtype).at[:N, :K].set(weight_eps)
    bp = jnp.zeros((1, Np), bias.dtype).at[0, :N].set(bias)

    grid = (Np // tn, Kp // tk)

    out_p = pl.pallas_call(
        bayes_linear_kernel,
        out_shape=jax.ShapeDtypeStruct((Bp, Np), x.dtype),
        grid_spec=pltpu.PrefetchScalarGridSpec(
            num_scalar_prefetch=0,
            grid=grid,
            in_specs=[
                pl.BlockSpec((Bp, tk), lambda n, k: (0, k)),   # x (B resident)
                pl.BlockSpec((tn, tk), lambda n, k: (n, k)),   # weight_mu
                pl.BlockSpec((tn, tk), lambda n, k: (n, k)),   # weight_sigma
                pl.BlockSpec((tn, tk), lambda n, k: (n, k)),   # weight_eps
                pl.BlockSpec((1, tn), lambda n, k: (0, n)),    # sampled bias
            ],
            out_specs=pl.BlockSpec((Bp, tn), lambda n, k: (0, n)),
            scratch_shapes=[pltpu.VMEM((Bp, tn), jnp.float32)],
        ),
        compiler_params=pltpu.CompilerParams(
            dimension_semantics=("parallel", "arbitrary")),
    )(xp, wmu, wsig, weps, bp)

    return out_p[:B, :N]


# ----------------------------------------------------------------------------
# Parameter initialization (plain-JAX glue, mirroring reset_parameters)
# ----------------------------------------------------------------------------
def _relative_distance_prior(w):
    """set_prior_to_relative_distance_to_nearest_power_of_two, in JAX."""
    # Guard exact zeros (log2(0) / divide-by-zero) — unlikely with Gaussian
    # init but cheap to protect against.
    absw = jnp.maximum(jnp.abs(w), jnp.float32(1e-30))
    sign = jnp.where(w < 0, -1.0, 1.0)
    pow2u = sign * 2.0 ** jnp.ceil(jnp.log2(absw))
    pow2d = sign * 2.0 ** jnp.floor(jnp.log2(absw))
    safe_w = sign * absw
    rel_u = jnp.abs((w - pow2u) / safe_w)
    rel_d = jnp.abs((w - pow2d) / safe_w)
    rel = rel_d * rel_u
    q75 = jnp.quantile(rel, 0.75)
    return jnp.clip(0.0025 * (rel / q75), 2.0 ** (-30), 0.05)


def init_bayes_linear_params(key, in_features, out_features):
    k_w, k_b = jax.random.split(key)
    # nn.init.normal_(weight_mu, mean=0.0, std=0.0001)
    weight_mu = 0.0001 * jax.random.normal(k_w, (out_features, in_features),
                                           dtype=jnp.float32)
    # nn.init.normal_(bias_mu, mean=0.0, std=1e-5)
    bias_mu = 1e-5 * jax.random.normal(k_b, (out_features,), dtype=jnp.float32)
    weight_sigma = _relative_distance_prior(weight_mu)
    bias_sigma = _relative_distance_prior(bias_mu)
    return weight_mu, weight_sigma, bias_mu, bias_sigma


# ----------------------------------------------------------------------------
# Demo / smoke test
# ----------------------------------------------------------------------------
if __name__ == "__main__":
    B, IN_F, OUT_F = 8, 32, 16

    key = jax.random.PRNGKey(0)
    k_params, k_x, k_weps, k_beps = jax.random.split(key, 4)

    weight_mu, weight_sigma, bias_mu, bias_sigma = init_bayes_linear_params(
        k_params, IN_F, OUT_F)

    x = jax.random.normal(k_x, (B, IN_F), dtype=jnp.float32)
    # Reparameterization noise (torch.randn_like equivalents), drawn outside
    # the kernel deterministically.
    weight_eps = jax.random.normal(k_weps, (OUT_F, IN_F), dtype=jnp.float32)
    bias_eps = jax.random.normal(k_beps, (OUT_F,), dtype=jnp.float32)

    out = bayes_linear_forward(x, weight_mu, weight_sigma, weight_eps,
                               bias_mu, bias_sigma, bias_eps)
    out = jax.block_until_ready(out)

    # Pure-JAX reference for sanity checking.
    w = weight_mu + jnp.maximum(weight_sigma, 2.0 ** (-30)) * weight_eps
    b = bias_mu + jnp.maximum(bias_sigma, 2.0 ** (-30)) * bias_eps
    ref = x @ w.T + b
    assert out.shape == (B, OUT_F)
    assert jnp.allclose(out, ref, atol=1e-5, rtol=1e-5)

    print("KERNEL_OK")
</pallas_src>

<mosaic_0001>
module attributes {stable_mosaic.version = 11 : i64} {
  func.func @bayes_linear_kernel(%arg0: i32, %arg1: i32, %arg2: memref<8x128xf32, #tpu.memory_space<vmem>>, %arg3: memref<128x128xf32, #tpu.memory_space<vmem>>, %arg4: memref<128x128xf32, #tpu.memory_space<vmem>>, %arg5: memref<128x128xf32, #tpu.memory_space<vmem>>, %arg6: memref<1x128xf32, #tpu.memory_space<vmem>>, %arg7: memref<8x128xf32, #tpu.memory_space<vmem>>, %arg8: memref<8x128xf32, #tpu.memory_space<vmem>>) attributes {dimension_semantics = [#tpu.dimension_semantics<parallel>, #tpu.dimension_semantics<arbitrary>], iteration_bounds = array<i64: 1, 1>, scalar_prefetch = 0 : i64, scratch_operands = 1 : i64, tpu.core_type = #tpu.core_type<tc>, window_params = [{transform_indices = @transform_0, window_bounds = array<i64: 8, 128>}, {transform_indices = @transform_1, window_bounds = array<i64: 128, 128>}, {transform_indices = @transform_2, window_bounds = array<i64: 128, 128>}, {transform_indices = @transform_3, window_bounds = array<i64: 128, 128>}, {transform_indices = @transform_4, window_bounds = array<i64: 1, 128>}, {transform_indices = @transform_5, window_bounds = array<i64: 8, 128>}]} {
    %c0_i32 = arith.constant 0 : i32
    %0 = arith.cmpi eq, %arg1, %c0_i32 : i32
    %1 = arith.extui %0 : i1 to i32
    %c0_i32_0 = arith.constant 0 : i32
    %2 = arith.cmpi ne, %1, %c0_i32_0 : i32
    scf.if %2 {
      %cst_15 = arith.constant 0.000000e+00 : f32
      %18 = vector.broadcast %cst_15 : f32 to vector<8x128xf32>
      %c0_16 = arith.constant 0 : index
      %c0_17 = arith.constant 0 : index
      %19 = vector.load %arg8[%c0_16, %c0_17] : memref<8x128xf32, #tpu.memory_space<vmem>>, vector<8x128xf32>
      tpu.vector_store %arg8[%c0_16, %c0_17], %18 {strides = array<i32>} : memref<8x128xf32, #tpu.memory_space<vmem>>, vector<8x128xf32>,
    } else {
    }
    %c0 = arith.constant 0 : index
    %c0_1 = arith.constant 0 : index
    %3 = vector.load %arg4[%c0, %c0_1] : memref<128x128xf32, #tpu.memory_space<vmem>>, vector<128x128xf32>
    %cst = arith.constant 9.31322574E-10 : f32
    %4 = vector.broadcast %cst : f32 to vector<128x128xf32>
    %5 = arith.maximumf %3, %4 : vector<128x128xf32>
    %c0_2 = arith.constant 0 : index
    %c0_3 = arith.constant 0 : index
    %6 = vector.load %arg3[%c0_2, %c0_3] : memref<128x128xf32, #tpu.memory_space<vmem>>, vector<128x128xf32>
    %c0_4 = arith.constant 0 : index
    %c0_5 = arith.constant 0 : index
    %7 = vector.load %arg5[%c0_4, %c0_5] : memref<128x128xf32, #tpu.memory_space<vmem>>, vector<128x128xf32>
    %8 = arith.mulf %5, %7 : vector<128x128xf32>
    %9 = arith.addf %6, %8 : vector<128x128xf32>
    %c0_6 = arith.constant 0 : index
    %c0_7 = arith.constant 0 : index
    %10 = vector.load %arg8[%c0_6, %c0_7] : memref<8x128xf32, #tpu.memory_space<vmem>>, vector<8x128xf32>
    %c0_8 = arith.constant 0 : index
    %c0_9 = arith.constant 0 : index
    %11 = vector.load %arg2[%c0_8, %c0_9] : memref<8x128xf32, #tpu.memory_space<vmem>>, vector<8x128xf32>
    %cst_10 = arith.constant dense<0.000000e+00> : vector<8x128xf32>
    %12 = tpu.matmul %11, %9, %cst_10 {dimension_numbers = #tpu.dot_dimension_numbers<[1], [1], [0], [0], [0, 0, 1, 0], [], []>} : vector<8x128xf32>, vector<128x128xf32>, vector<8x128xf32> -> vector<8x128xf32>
    %13 = arith.addf %10, %12 : vector<8x128xf32>
    %c0_11 = arith.constant 0 : index
    %c0_12 = arith.constant 0 : index
    %14 = vector.load %arg8[%c0_11, %c0_12] : memref<8x128xf32, #tpu.memory_space<vmem>>, vector<8x128xf32>
    tpu.vector_store %arg8[%c0_11, %c0_12], %13 {strides = array<i32>} : memref<8x128xf32, #tpu.memory_space<vmem>>, vector<8x128xf32>,
    %c0_i32_13 = arith.constant 0 : i32
    %15 = arith.cmpi eq, %arg1, %c0_i32_13 : i32
    %16 = arith.extui %15 : i1 to i32
    %c0_i32_14 = arith.constant 0 : i32
    %17 = arith.cmpi ne, %16, %c0_i32_14 : i32
    scf.if %17 {
      %c0_15 = arith.constant 0 : index
      %c0_16 = arith.constant 0 : index
      %18 = vector.load %arg8[%c0_15, %c0_16] : memref<8x128xf32, #tpu.memory_space<vmem>>, vector<8x128xf32>
      %c0_17 = arith.constant 0 : index
      %c0_18 = arith.constant 0 : index
      %19 = vector.load %arg6[%c0_17, %c0_18] : memref<1x128xf32, #tpu.memory_space<vmem>>, vector<1x128xf32>
      %20 = vector.broadcast %19 : vector<1x128xf32> to vector<8x128xf32>
      %21 = arith.addf %18, %20 : vector<8x128xf32>
      %c0_19 = arith.constant 0 : index
      %c0_20 = arith.constant 0 : index
      %22 = vector.load %arg7[%c0_19, %c0_20] : memref<8x128xf32, #tpu.memory_space<vmem>>, vector<8x128xf32>
      tpu.vector_store %arg7[%c0_19, %c0_20], %21 {strides = array<i32>} : memref<8x128xf32, #tpu.memory_space<vmem>>, vector<8x128xf32>,
    } else {
    }
    return
  }
  func.func @transform_0(%arg0: i32, %arg1: i32) -> (i32, i32) {
    %c0_i32 = arith.constant 0 : i32
    %c0_i32_0 = arith.constant 0 : i32
    return %c0_i32, %arg1 : i32, i32
  }
  func.func @transform_1(%arg0: i32, %arg1: i32) -> (i32, i32) {
    %c0_i32 = arith.constant 0 : i32
    return %arg0, %arg1 : i32, i32
  }
  func.func @transform_2(%arg0: i32, %arg1: i32) -> (i32, i32) {
    %c0_i32 = arith.constant 0 : i32
    return %arg0, %arg1 : i32, i32
  }
  func.func @transform_3(%arg0: i32, %arg1: i32) -> (i32, i32) {
    %c0_i32 = arith.constant 0 : i32
    return %arg0, %arg1 : i32, i32
  }
  func.func @transform_4(%arg0: i32, %arg1: i32) -> (i32, i32) {
    %c0_i32 = arith.constant 0 : i32
    %c0_i32_0 = arith.constant 0 : i32
    return %c0_i32, %arg0 : i32, i32
  }
  func.func @transform_5(%arg0: i32, %arg1: i32) -> (i32, i32) {
    %c0_i32 = arith.constant 0 : i32
    %c0_i32_0 = arith.constant 0 : i32
    return %c0_i32, %arg0 : i32, i32
  }
}

</mosaic_0001>

<llo_original>
// kernel: tpu_custom_call.1
$region0: #{tpu_custom_call.1}
  #allocation0 [shape = 'u32[]', space=smem, size = 0x4, offset = 0x4, fixed_abs, tag = 'smem constant byte address 0x4 - core index']
  #allocation1 [shape = 'u32[144,128]{1,0:T(1,128)}', space=vmem, size = 0x12000, scoped, tag = 'internal scratch']
  #allocation2 [shape = 'f32[8,128]{1,0:T(8,128)}', space=vmem, size = 0x1000, scoped, tag = 'scratch operand']
  %s0 = inlined_call_operand.hbm [shape: f32[8,128], index: 0, kind: input, shape index: {}]
  %s1 = inlined_call_operand.hbm [shape: f32[128,128], index: 1, kind: input, shape index: {}]
  %s2 = inlined_call_operand.hbm [shape: f32[128,128], index: 2, kind: input, shape index: {}]
  %s3 = inlined_call_operand.hbm [shape: f32[128,128], index: 3, kind: input, shape index: {}]
  %s4 = inlined_call_operand.vmem [shape: f32[1,128], index: 4, kind: input, shape index: {}]
  %s5 = inlined_call_operand.hbm [shape: f32[8,128], index: 5, kind: output, shape index: {}]
  %s6 = sld [smem:[#allocation0]]
  $region54: #{tpu_custom_call.1} parent=0
    _
  %s8 = ssub.s32 1, %s6
  %s9 = scalar_select 0, %s8, %s6
  $region1: #{tpu_custom_call.1} parent=0
    #allocation3 [shape = 'u8[4096]{0}', space=vmem, size = 0x1000, scoped, tag = 'input window, operand 0, single buffered']
    #allocation4 [shape = 's32[1]{0}', space=sflag, size = 0x4, scoped, tag = 'scoped memory for tpu_custom_call.1']
    #allocation5 [shape = 's32[1]{0}', space=sflag, size = 0x4, scoped, tag = 'scoped memory for tpu_custom_call.1']
    #allocation6 [shape = 'u8[65536]{0}', space=vmem, size = 0x10000, scoped, tag = 'input window, operand 1, single buffered']
    #allocation7 [shape = 's32[1]{0}', space=sflag, size = 0x4, scoped, tag = 'scoped memory for tpu_custom_call.1']
    #allocation8 [shape = 'u8[65536]{0}', space=vmem, size = 0x10000, scoped, tag = 'input window, operand 2, single buffered']
    #allocation9 [shape = 'u8[65536]{0}', space=vmem, size = 0x10000, scoped, tag = 'input window, operand 3, single buffered']
    #allocation10 [shape = 's32[1]{0}', space=sflag, size = 0x4, scoped, tag = 'scoped memory for tpu_custom_call.1']
    #allocation11 [shape = 'u8[4096]{0}', space=vmem, size = 0x1000, scoped, tag = 'output window, operand 0, single buffered']
    %10 = vsyncpa [#allocation4], 0
    %11 = vsyncpa [#allocation7], 0
    %12 = vsyncpa [#allocation10], 0
    %13 = vsyncpa [#allocation5], 0
    // Predicated region
    $region2: #{tpu_custom_call.1} parent=1 // pred_check
      _
    $region3: #{tpu_custom_call.1} parent=1 // pred_check_branch
      %15 = sbr.rel (0) target = $region5
    $region4: #{tpu_custom_call.1} parent=1 // pred_region
      %s17 = ssub.s32 128, 128
      %18 = vsyncadd [#allocation4], %s17
      %s20 = sshll.u32 [#allocation3], 4
      %s21 = int_to_ptr.vmem [resolvable:$true] %s20
      %23 = dma.hbm_to_vmem [thread:$0]  %s0, 128, %s21, [#allocation4]
    $region5: #{tpu_custom_call.1} parent=1 // pred_fallthru
      _
    // Predicated region
    $region6: #{tpu_custom_call.1} parent=1 // pred_check
      _
    $region7: #{tpu_custom_call.1} parent=1 // pred_check_branch
      %25 = sbr.rel (0) target = $region9
    $region8: #{tpu_custom_call.1} parent=1 // pred_region
      %s27 = ssub.s32 2048, 2048
      %28 = vsyncadd [#allocation7], %s27
      %s29 = sshll.u32 [#allocation6], 4
      %s30 = int_to_ptr.vmem [resolvable:$true] %s29
      %35 = dma.hbm_to_vmem [thread:$0]  %s1, 2048, %s30, [#allocation7], 128, 128, 8
    $region9: #{tpu_custom_call.1} parent=1 // pred_fallthru
      _
    // Predicated region
    $region10: #{tpu_custom_call.1} parent=1 // pred_check
      _
    $region11: #{tpu_custom_call.1} parent=1 // pred_check_branch
      %37 = sbr.rel (0) target = $region13
    $region12: #{tpu_custom_call.1} parent=1 // pred_region
      %s39 = ssub.s32 2048, 2048
      %40 = vsyncadd [#allocation7], %s39
      %s41 = sshll.u32 [#allocation8], 4
      %s42 = int_to_ptr.vmem [resolvable:$true] %s41
      %47 = dma.hbm_to_vmem [thread:$0]  %s2, 2048, %s42, [#allocation7], 128, 128, 8
    $region13: #{tpu_custom_call.1} parent=1 // pred_fallthru
      _
    // Predicated region
    $region14: #{tpu_custom_call.1} parent=1 // pred_check
      _
    $region15: #{tpu_custom_call.1} parent=1 // pred_check_branch
      %49 = sbr.rel (0) target = $region17
    $region16: #{tpu_custom_call.1} parent=1 // pred_region
      %s51 = ssub.s32 2048, 2048
      %52 = vsyncadd [#allocation10], %s51
      %s53 = sshll.u32 [#allocation9], 4
      %s54 = int_to_ptr.vmem [resolvable:$true] %s53
      %59 = dma.hbm_to_vmem [thread:$0]  %s3, 2048, %s54, [#allocation10], 128, 128, 8
    $region17: #{tpu_custom_call.1} parent=1 // pred_fallthru
      _
    // Predicated region
    $region18: #{tpu_custom_call.1} parent=1 // pred_check
      _
    $region19: #{tpu_custom_call.1} parent=1 // pred_check_branch
      %61 = sbr.rel (0) target = $region21
    $region20: #{tpu_custom_call.1} parent=1 // pred_region
      _
    $region21: #{tpu_custom_call.1} parent=1 // pred_fallthru
      _
    // Predicated region
    $region22: #{tpu_custom_call.1} parent=1 // pred_check
      _
    $region23: #{tpu_custom_call.1} parent=1 // pred_check_branch
      %63 = sbr.rel (0) target = $region25
    $region24: #{tpu_custom_call.1} parent=1 // pred_region
      %64 = dma.done [#allocation4], 128
    $region25: #{tpu_custom_call.1} parent=1 // pred_fallthru
      _
    // Predicated region
    $region26: #{tpu_custom_call.1} parent=1 // pred_check
      _
    $region27: #{tpu_custom_call.1} parent=1 // pred_check_branch
      %66 = sbr.rel (0) target = $region29
    $region28: #{tpu_custom_call.1} parent=1 // pred_region
      %67 = dma.done [#allocation7], 2048
    $region29: #{tpu_custom_call.1} parent=1 // pred_fallthru
      _
    // Predicated region
    $region30: #{tpu_custom_call.1} parent=1 // pred_check
      _
    $region31: #{tpu_custom_call.1} parent=1 // pred_check_branch
      %69 = sbr.rel (0) target = $region33
    $region32: #{tpu_custom_call.1} parent=1 // pred_region
      %70 = dma.done [#allocation7], 2048
    $region33: #{tpu_custom_call.1} parent=1 // pred_fallthru
      _
    // Predicated region
    $region34: #{tpu_custom_call.1} parent=1 // pred_check
      _
    $region35: #{tpu_custom_call.1} parent=1 // pred_check_branch
      %72 = sbr.rel (0) target = $region37
    $region36: #{tpu_custom_call.1} parent=1 // pred_region
      %73 = dma.done [#allocation10], 2048
    $region37: #{tpu_custom_call.1} parent=1 // pred_fallthru
      _
    %p74 = scmp.eq.s32.totalorder 0, 0
    // Predicated region
    $region38: #{tpu_custom_call.1} parent=1 // pred_check
      %p75 = pneg %p74
    $region39: #{tpu_custom_call.1} parent=1 // pred_check_branch
      %77 = sbr.rel (%p75) target = $region41
    $region40: #{tpu_custom_call.1} parent=1 // pred_region
      %78 = vst [vmem:[#allocation2] sm:$0xff] 0.0
    $region41: #{tpu_custom_call.1} parent=1 // pred_fallthru
      _
    %v79 = vld [vmem:[#allocation8] sm:$0xff]
    %v80 = vld [vmem:[#allocation8 + $0x8] sm:$0xff]
    %v81 = vld [vmem:[#allocation8 + $0x10] sm:$0xff]
    %v82 = vld [vmem:[#allocation8 + $0x18] sm:$0xff]
    %v83 = vld [vmem:[#allocation8 + $0x20] sm:$0xff]
    %v84 = vld [vmem:[#allocation8 + $0x28] sm:$0xff]
    %v85 = vld [vmem:[#allocation8 + $0x30] sm:$0xff]
    %v86 = vld [vmem:[#allocation8 + $0x38] sm:$0xff]
    %v87 = vld [vmem:[#allocation8 + $0x40] sm:$0xff]
    %v88 = vld [vmem:[#allocation8 + $0x48] sm:$0xff]
    %v89 = vld [vmem:[#allocation8 + $0x50] sm:$0xff]
    %v90 = vld [vmem:[#allocation8 + $0x58] sm:$0xff]
    %v91 = vld [vmem:[#allocation8 + $0x60] sm:$0xff]
    %v92 = vld [vmem:[#allocation8 + $0x68] sm:$0xff]
    %v93 = vld [vmem:[#allocation8 + $0x70] sm:$0xff]
    %v94 = vld [vmem:[#allocation8 + $0x78] sm:$0xff]
    %v95 = vmax.f32 %v79, 9.313226e-10
    %v96 = vmax.f32 %v80, 9.313226e-10
    %v97 = vmax.f32 %v81, 9.313226e-10
    %v98 = vmax.f32 %v82, 9.313226e-10
    %v99 = vmax.f32 %v83, 9.313226e-10
    %v100 = vmax.f32 %v84, 9.313226e-10
    %v101 = vmax.f32 %v85, 9.313226e-10
    %v102 = vmax.f32 %v86, 9.313226e-10
    %v103 = vmax.f32 %v87, 9.313226e-10
    %v104 = vmax.f32 %v88, 9.313226e-10
    %v105 = vmax.f32 %v89, 9.313226e-10
    %v106 = vmax.f32 %v90, 9.313226e-10
    %v107 = vmax.f32 %v91, 9.313226e-10
    %v108 = vmax.f32 %v92, 9.313226e-10
    %v109 = vmax.f32 %v93, 9.313226e-10
    %v110 = vmax.f32 %v94, 9.313226e-10
    %v111 = vld [vmem:[#allocation6] sm:$0xff]
    %v112 = vld [vmem:[#allocation6 + $0x8] sm:$0xff]
    %v113 = vld [vmem:[#allocation6 + $0x10] sm:$0xff]
    %v114 = vld [vmem:[#allocation6 + $0x18] sm:$0xff]
    %v115 = vld [vmem:[#allocation6 + $0x20] sm:$0xff]
    %v116 = vld [vmem:[#allocation6 + $0x28] sm:$0xff]
    %v117 = vld [vmem:[#allocation6 + $0x30] sm:$0xff]
    %v118 = vld [vmem:[#allocation6 + $0x38] sm:$0xff]
    %v119 = vld [vmem:[#allocation6 + $0x40] sm:$0xff]
    %v120 = vld [vmem:[#allocation6 + $0x48] sm:$0xff]
    %v121 = vld [vmem:[#allocation6 + $0x50] sm:$0xff]
    %v122 = vld [vmem:[#allocation6 + $0x58] sm:$0xff]
    %v123 = vld [vmem:[#allocation6 + $0x60] sm:$0xff]
    %v124 = vld [vmem:[#allocation6 + $0x68] sm:$0xff]
    %v125 = vld [vmem:[#allocation6 + $0x70] sm:$0xff]
    %v126 = vld [vmem:[#allocation6 + $0x78] sm:$0xff]
    %v127 = vld [vmem:[#allocation9] sm:$0xff]
    %v128 = vld [vmem:[#allocation9 + $0x8] sm:$0xff]
    %v129 = vld [vmem:[#allocation9 + $0x10] sm:$0xff]
    %v130 = vld [vmem:[#allocation9 + $0x18] sm:$0xff]
    %v131 = vld [vmem:[#allocation9 + $0x20] sm:$0xff]
    %v132 = vld [vmem:[#allocation9 + $0x28] sm:$0xff]
    %v133 = vld [vmem:[#allocation9 + $0x30] sm:$0xff]
    %v134 = vld [vmem:[#allocation9 + $0x38] sm:$0xff]
    %v135 = vld [vmem:[#allocation9 + $0x40] sm:$0xff]
    %v136 = vld [vmem:[#allocation9 + $0x48] sm:$0xff]
    %v137 = vld [vmem:[#allocation9 + $0x50] sm:$0xff]
    %v138 = vld [vmem:[#allocation9 + $0x58] sm:$0xff]
    %v139 = vld [vmem:[#allocation9 + $0x60] sm:$0xff]
    %v140 = vld [vmem:[#allocation9 + $0x68] sm:$0xff]
    %v141 = vld [vmem:[#allocation9 + $0x70] sm:$0xff]
    %v142 = vld [vmem:[#allocation9 + $0x78] sm:$0xff]
    %v143 = vmul.f32 %v95, %v127
    %v144 = vmul.f32 %v96, %v128
    %v145 = vmul.f32 %v97, %v129
    %v146 = vmul.f32 %v98, %v130
    %v147 = vmul.f32 %v99, %v131
    %v148 = vmul.f32 %v100, %v132
    %v149 = vmul.f32 %v101, %v133
    %v150 = vmul.f32 %v102, %v134
    %v151 = vmul.f32 %v103, %v135
    %v152 = vmul.f32 %v104, %v136
    %v153 = vmul.f32 %v105, %v137
    %v154 = vmul.f32 %v106, %v138
    %v155 = vmul.f32 %v107, %v139
    %v156 = vmul.f32 %v108, %v140
    %v157 = vmul.f32 %v109, %v141
    %v158 = vmul.f32 %v110, %v142
    %v159 = vadd.f32 %v111, %v143
    %v160 = vadd.f32 %v112, %v144
    %v161 = vadd.f32 %v113, %v145
    %v162 = vadd.f32 %v114, %v146
    %v163 = vadd.f32 %v115, %v147
    %v164 = vadd.f32 %v116, %v148
    %v165 = vadd.f32 %v117, %v149
    %v166 = vadd.f32 %v118, %v150
    %v167 = vadd.f32 %v119, %v151
    %v168 = vadd.f32 %v120, %v152
    %v169 = vadd.f32 %v121, %v153
    %v170 = vadd.f32 %v122, %v154
    %v171 = vadd.f32 %v123, %v155
    %v172 = vadd.f32 %v124, %v156
    %v173 = vadd.f32 %v125, %v157
    %v174 = vadd.f32 %v126, %v158
    %v175 = vld [vmem:[#allocation2] sm:$0xff]
    %v176 = vld [vmem:[#allocation3] sm:$0xff]
    %177 = vmatprep.subr.mxu0 0.0
    %178 = vmatpush1.xpose.msra.mxu0 %v159
    %179 = vmatprep.subr.mxu0 0.0
    %180 = vmatpush1.xpose.msra.mxu0 %v160
    %181 = vmatprep.subr.mxu0 0.0
    %182 = vmatpush1.xpose.msra.mxu0 %v161
    %183 = vmatprep.subr.mxu0 0.0
    %184 = vmatpush1.xpose.msra.mxu0 %v162
    %185 = vmatprep.subr.mxu0 0.0
    %186 = vmatpush1.xpose.msra.mxu0 %v163
    %187 = vmatprep.subr.mxu0 0.0
    %188 = vmatpush1.xpose.msra.mxu0 %v164
    %189 = vmatprep.subr.mxu0 0.0
    %190 = vmatpush1.xpose.msra.mxu0 %v165
    %191 = vmatprep.subr.mxu0 0.0
    %192 = vmatpush1.xpose.msra.mxu0 %v166
    %193 = vmatprep.subr.mxu0 0.0
    %194 = vmatpush1.xpose.msra.mxu0 %v167
    %195 = vmatprep.subr.mxu0 0.0
    %196 = vmatpush1.xpose.msra.mxu0 %v168
    %197 = vmatprep.subr.mxu0 0.0
    %198 = vmatpush1.xpose.msra.mxu0 %v169
    %199 = vmatprep.subr.mxu0 0.0
    %200 = vmatpush1.xpose.msra.mxu0 %v170
    %201 = vmatprep.subr.mxu0 0.0
    %202 = vmatpush1.xpose.msra.mxu0 %v171
    %203 = vmatprep.subr.mxu0 0.0
    %204 = vmatpush1.xpose.msra.mxu0 %v172
    %205 = vmatprep.subr.mxu0 0.0
    %206 = vmatpush1.xpose.msra.mxu0 %v173
    %207 = vmatprep.subr.mxu0 0.0
    %208 = vmatpush1.xpose.msra.mxu0 %v174
    %209 = vmatprep.subr.mxu0 0.0
    %210 = vmatpush1.xpose.msra.mxu0 0.0
    %211 = vmatprep.subr.mxu0 0.0
    %212 = vmatpush1.xpose.msra.mxu0 0.0
    %213 = vmatprep.subr.mxu0 0.0
    %214 = vmatpush1.xpose.msra.mxu0 0.0
    %215 = vmatprep.subr.mxu0 0.0
    %216 = vmatpush1.xpose.msra.mxu0 0.0
    %217 = vmatprep.subr.mxu0 0.0
    %218 = vmatpush1.xpose.msra.mxu0 0.0
    %219 = vmatprep.subr.mxu0 0.0
    %220 = vmatpush1.xpose.msra.mxu0 0.0
    %221 = vmatprep.subr.mxu0 0.0
    %222 = vmatpush1.xpose.msra.mxu0 0.0
    %223 = vmatprep.subr.mxu0 0.0
    %224 = vmatpush1.xpose.msra.mxu0 0.0
    %225 = vmatprep.subr.mxu0 0.0
    %226 = vmatpush1.xpose.msra.mxu0 0.0
    %227 = vmatprep.subr.mxu0 0.0
    %228 = vmatpush1.xpose.msra.mxu0 0.0
    %229 = vmatprep.subr.mxu0 0.0
    %230 = vmatpush1.xpose.msra.mxu0 0.0
    %231 = vmatprep.subr.mxu0 0.0
    %232 = vmatpush1.xpose.msra.mxu0 0.0
    %233 = vmatprep.subr.mxu0 0.0
    %234 = vmatpush1.xpose.msra.mxu0 0.0
    %235 = vmatprep.subr.mxu0 0.0
    %236 = vmatpush1.xpose.msra.mxu0 0.0
    %237 = vmatprep.subr.mxu0 0.0
    %238 = vmatpush1.xpose.msra.mxu0 0.0
    %239 = vmatprep.subr.mxu0 0.0
    %240 = vmatpush1.xpose.msra.mxu0 0.0
    %241 = vmatprep.mubr.f32.mxu0 0.0
    %242 = vmatmul.mubr.f32.gmra.mrb[0].mxu0 %v176
    %v243 = vpop.f32.mrb[0].mxu0
    %v244 = vadd.f32 0.0, %v243
    %v245 = vpop.f32.mrb[0].mxu0
    %246 = vdwg.mxu0
    %v247 = vadd.f32 %v175, %v244
    %248 = vst [vmem:[#allocation2] sm:$0xff] %v247
    // Predicated region
    $region42: #{tpu_custom_call.1} parent=1 // pred_check
      %p249 = pneg %p74
    $region43: #{tpu_custom_call.1} parent=1 // pred_check_branch
      %251 = sbr.rel (%p249) target = $region45
    $region44: #{tpu_custom_call.1} parent=1 // pred_region
      %v252 = vld [vmem:[#allocation2] sm:$0xff]
      %v253 = vld [vmem:[%s4] sm:$0x1]
      %v255 = vlaneseq
      %v256 = vshrl.u32 %v255, 7
      %v257 = vsub.s32 0, %v256
      %v258 = vrot.slane %v253, %v257
      %v260 = vadd.f32 %v252, %v258
      %261 = vst [vmem:[#allocation11] sm:$0xff] %v260
    $region45: #{tpu_custom_call.1} parent=1 // pred_fallthru
      _
    // Predicated region
    $region46: #{tpu_custom_call.1} parent=1 // pred_check
      _
    $region47: #{tpu_custom_call.1} parent=1 // pred_check_branch
      %263 = sbr.rel (0) target = $region49
    $region48: #{tpu_custom_call.1} parent=1 // pred_region
      %s265 = ssub.s32 128, 128
      %266 = vsyncadd [#allocation5], %s265
      %s268 = sshll.u32 [#allocation11], 4
      %s269 = int_to_ptr.vmem [resolvable:$true] %s268
      %271 = dma.vmem_to_hbm [thread:$0]  %s269, 128, %s5, [#allocation5]
    $region49: #{tpu_custom_call.1} parent=1 // pred_fallthru
      _
    // Predicated region
    $region50: #{tpu_custom_call.1} parent=1 // pred_check
      _
    $region51: #{tpu_custom_call.1} parent=1 // pred_check_branch
      %273 = sbr.rel (0) target = $region53
    $region52: #{tpu_custom_call.1} parent=1 // pred_region
      %274 = dma.done [#allocation5], 128
    $region53: #{tpu_custom_call.1} parent=1 // pred_fallthru
      _
    %275 = vsyncpa [#allocation4], 1
    %276 = vsyncpa [#allocation7], 1
    %277 = vsyncpa [#allocation10], 1
    %278 = vsyncpa [#allocation5], 1

</llo_original>
